<compile_context>
chip_gen: v6e
topology: v6e:2x2x1
jax: 0.10.0
libtpu: 0.0.40
codegen_flags: <defaults>
</compile_context>

<pallas_src>
from functools import partial

import jax
import jax.numpy as jnp
from jax import lax
from jax.experimental import pallas as pl
from jax.experimental.pallas import tpu as pltpu


# ----------------------------------------------------------------------------
# Kernels
# ----------------------------------------------------------------------------
def _layernorm_kernel(x_ref, g_ref, b_ref, o_ref, *, eps):
    # x_ref: (tm, K); g_ref/b_ref: (1, K); o_ref: (tm, K) in compute dtype.
    x = x_ref[...].astype(jnp.float32)
    mean = jnp.mean(x, axis=-1, keepdims=True)
    xc = x - mean
    var = jnp.mean(xc * xc, axis=-1, keepdims=True)
    rstd = lax.rsqrt(var + eps)
    o_ref[...] = ((xc * rstd) * g_ref[...].astype(jnp.float32)
                  + b_ref[...].astype(jnp.float32)).astype(o_ref.dtype)


def _matmul_bias_kernel(xn_ref, wt_ref, b_ref, o_ref):
    # Single-K-block fast path: no accumulator scratch, direct write.
    acc = jnp.dot(xn_ref[...], wt_ref[...], preferred_element_type=jnp.float32)
    o_ref[...] = (acc + b_ref[...].astype(jnp.float32)).astype(o_ref.dtype)


def _matmul_bias_acc_kernel(xn_ref, wt_ref, b_ref, o_ref, acc_ref, *, tk):
    # xn_ref : (tm, K)  normalized activations, resident across j and k
    # wt_ref : (tk, tn) pre-transposed weight tile
    # b_ref  : (1, tn)  bias tile
    # o_ref  : (tm, tn) logits tile
    # acc_ref: VMEM (tm, tn) f32 accumulator
    k = pl.program_id(2)

    @pl.when(k == 0)
    def _init():
        acc_ref[...] = jnp.zeros_like(acc_ref)

    off = pl.multiple_of(k * tk, tk)
    acc_ref[...] += jnp.dot(xn_ref[:, pl.ds(off, tk)], wt_ref[...],
                            preferred_element_type=jnp.float32)

    @pl.when(k == pl.num_programs(2) - 1)
    def _epilogue():
        o_ref[...] = (acc_ref[...]
                      + b_ref[...].astype(jnp.float32)).astype(o_ref.dtype)


# ----------------------------------------------------------------------------
# Tiling helpers
# ----------------------------------------------------------------------------
def _round_up(v, m):
    return ((v + m - 1) // m) * m


def _sublane_multiple(dtype):
    # native sublane packing: 8 for 4-byte, 16 for 2-byte, 32 for 1-byte dtypes
    return max(8, 32 // jnp.dtype(dtype).itemsize)


def _pick_tm(M, sub):
    if M <= 256:
        tm = _round_up(M, sub)
        return tm, tm
    best_tm, best_mp = 256, _round_up(M, 256)
    for t in (128, 64):
        mp = _round_up(M, t)
        if mp < best_mp:
            best_tm, best_mp = t, mp
    return best_tm, best_mp


def _pick_tn(Np):
    for t in (512, 256):
        if Np % t == 0:
            return t
    return 128


def _pick_tk(K):
    if K % 128 == 0:
        for t in (512, 256):
            if K % t == 0:
                return t
        return 128
    return K  # tiny / odd K: fold the whole reduction into one block


# ----------------------------------------------------------------------------
# Forward wrapper
# ----------------------------------------------------------------------------
def categorical_head_logits(x, gamma, beta, w_t, bias, *, out_features=None,
                            eps=1e-5):
    """x: (..., K); gamma/beta: (K,); w_t: (K, Np) pre-transposed (and ideally
    pre-padded at init); bias: (Np,). Returns logits (..., out_features)."""
    K = x.shape[-1]
    Np = w_t.shape[1]
    N = int(out_features) if out_features is not None else Np
    lead = x.shape[:-1]
    x2d = x.reshape(-1, K)
    M = x2d.shape[0]
    out_dtype = x.dtype
    cdtype = w_t.dtype  # compute dtype for the matmul operands

    # Fallback padding only (prefer pre-padding once in init, not per call).
    if Np % 128 != 0:
        new_np = _round_up(Np, 128)
        w_t = jnp.pad(w_t, ((0, 0), (0, new_np - Np)))
        bias = jnp.pad(bias, ((0, new_np - Np),))
        Np = new_np
    assert bias.shape[0] == Np, "bias must match (padded) weight columns"

    sub = _sublane_multiple(cdtype)
    tm, Mp = _pick_tm(M, sub)
    tn = _pick_tn(Np)
    tk = _pick_tk(K)

    if Mp != M:
        x2d = jnp.pad(x2d, ((0, Mp - M), (0, 0)))

    g_row = gamma.reshape(1, K)
    be_row = beta.reshape(1, K)
    b_row = bias.reshape(1, Np)

    gm, gn, gk = Mp // tm, Np // tn, K // tk
    single_k = gk == 1

    xsize = jnp.dtype(x2d.dtype).itemsize
    csize = jnp.dtype(cdtype).itemsize
    wsize = jnp.dtype(w_t.dtype).itemsize
    osize = jnp.dtype(out_dtype).itemsize

    # ---- LayerNorm: computed exactly once per row, written in compute dtype
    ln_cost = pl.CostEstimate(
        flops=8 * Mp * K,
        transcendentals=Mp,
        bytes_accessed=Mp * K * (xsize + csize) + 2 * K * csize,
    )
    xn = pl.pallas_call(
        partial(_layernorm_kernel, eps=eps),
        out_shape=jax.ShapeDtypeStruct((Mp, K), cdtype),
        grid_spec=pltpu.PrefetchScalarGridSpec(
            num_scalar_prefetch=0,
            grid=(gm,),
            in_specs=[
                pl.BlockSpec((tm, K), lambda i: (i, 0)),
                pl.BlockSpec((1, K), lambda i: (0, 0)),
                pl.BlockSpec((1, K), lambda i: (0, 0)),
            ],
            out_specs=pl.BlockSpec((tm, K), lambda i: (i, 0)),
        ),
        compiler_params=pltpu.CompilerParams(
            dimension_semantics=("parallel",)),
        cost_estimate=ln_cost,
    )(x2d, g_row, be_row)

    # ---- Tiled matmul + bias (MXU, f32 accumulate) ----
    mm_cost = pl.CostEstimate(
        flops=2 * Mp * Np * K,
        transcendentals=0,
        bytes_accessed=Mp * K * csize + K * Np * wsize + Np * wsize
                       + Mp * Np * osize,
    )
    vmem_est = (2 * tm * K * csize            # resident xn tile (double-buffered)
                + 2 * tk * tn * wsize         # W^T tiles
                + 2 * tn * wsize              # bias tiles
                + 2 * tm * tn * osize         # output tiles
                + (0 if single_k else tm * tn * 4))   # f32 accumulator
    vmem_limit = int(min(max(vmem_est * 3 // 2 + (2 << 20), 16 << 20), 64 << 20))

    if single_k:
        out = pl.pallas_call(
            _matmul_bias_kernel,
            out_shape=jax.ShapeDtypeStruct((Mp, Np), out_dtype),
            grid_spec=pltpu.PrefetchScalarGridSpec(
                num_scalar_prefetch=0,
                grid=(gm, gn),
                in_specs=[
                    pl.BlockSpec((tm, K), lambda i, j: (i, 0)),
                    pl.BlockSpec((K, tn), lambda i, j: (0, j)),
                    pl.BlockSpec((1, tn), lambda i, j: (0, j)),
                ],
                out_specs=pl.BlockSpec((tm, tn), lambda i, j: (i, j)),
            ),
            compiler_params=pltpu.CompilerParams(
                dimension_semantics=("parallel", "parallel"),
                vmem_limit_bytes=vmem_limit),
            cost_estimate=mm_cost,
        )(xn, w_t, b_row)
    else:
        out = pl.pallas_call(
            partial(_matmul_bias_acc_kernel, tk=tk),
            out_shape=jax.ShapeDtypeStruct((Mp, Np), out_dtype),
            grid_spec=pltpu.PrefetchScalarGridSpec(
                num_scalar_prefetch=0,
                grid=(gm, gn, gk),
                in_specs=[
                    pl.BlockSpec((tm, K), lambda i, j, k: (i, 0)),   # resident
                    pl.BlockSpec((tk, tn), lambda i, j, k: (k, j)),  # W^T tile
                    pl.BlockSpec((1, tn), lambda i, j, k: (0, j)),   # bias tile
                ],
                out_specs=pl.BlockSpec((tm, tn), lambda i, j, k: (i, j)),
                scratch_shapes=[pltpu.VMEM((tm, tn), jnp.float32)],
            ),
            compiler_params=pltpu.CompilerParams(
                dimension_semantics=("parallel", "parallel", "arbitrary"),
                vmem_limit_bytes=vmem_limit),
            cost_estimate=mm_cost,
        )(xn, w_t, b_row)

    out = out[:M, :N]
    return out.reshape(*lead, N)


# TODO(synk): torch.distributions.Categorical has no Pallas equivalent; the
# kernel returns logits, and loss/sample below are thin JAX ops on them.
def categorical_head_loss(logits, target):
    log_probs = jax.nn.log_softmax(logits, axis=-1)
    return -jnp.take_along_axis(log_probs, target[..., None], axis=-1)[..., 0]


def categorical_head_sample(key, logits):
    return jax.random.categorical(key, logits, axis=-1)


def init_categorical_head_params(key, in_features, out_features,
                                 dtype=jnp.bfloat16):
    """Matches CategorialHead.__init__: LayerNorm(gamma=1, beta=0) + Linear
    with xavier_uniform_ weight and zero bias.  The weight is pre-transposed
    to (in, out) and pre-padded to a lane/tile multiple ONCE here so the
    forward pass never pays weight.T or a per-call K x N jnp.pad."""
    wkey, _ = jax.random.split(key)
    bound = (6.0 / (in_features + out_features)) ** 0.5
    weight = jax.random.uniform(wkey, (out_features, in_features),
                                dtype=jnp.float32,
                                minval=-bound, maxval=bound).astype(dtype)
    w_t = jnp.asarray(weight.T)                       # (in, out)
    pad_to = 512 if out_features > 512 else 128       # lane-dense output tiles
    n_pad = _round_up(out_features, pad_to)
    if n_pad != out_features:
        w_t = jnp.pad(w_t, ((0, 0), (0, n_pad - out_features)))
    return {
        "w_t": w_t,                                    # (in, Np)  pre-padded
        "b": jnp.zeros((n_pad,), dtype=dtype),         # (Np,)     pre-padded
        "gamma": jnp.ones((in_features,), dtype=dtype),
        "beta": jnp.zeros((in_features,), dtype=dtype),
        "out_features": out_features,
    }


if __name__ == "__main__":
    key = jax.random.PRNGKey(0)
    kx, kp, ks = jax.random.split(key, 3)

    batch, seq, in_features, out_features = 2, 8, 32, 64
    x = jax.random.normal(kx, (batch, seq, in_features), dtype=jnp.float32)
    # f32 params here only for a tight numerical check; default is bf16.
    params = init_categorical_head_params(kp, in_features, out_features,
                                          dtype=jnp.float32)

    logits = categorical_head_logits(
        x, params["gamma"], params["beta"], params["w_t"], params["b"],
        out_features=params["out_features"])
    logits = jax.block_until_ready(logits)

    # plain-JAX reference (LayerNorm + Linear) on the un-padded weight view
    w_ref = params["w_t"][:, :out_features]
    b_ref = params["b"][:out_features]
    mean = x.mean(-1, keepdims=True)
    var = ((x - mean) ** 2).mean(-1, keepdims=True)
    xn = (x - mean) / jnp.sqrt(var + 1e-5) * params["gamma"] + params["beta"]
    ref = xn @ w_ref + b_ref

    assert logits.shape == (batch, seq, out_features)
    assert jnp.allclose(logits, ref, atol=1e-4, rtol=1e-4)

    # distribution semantics (loss / sample) from the logits
    target = jnp.zeros((batch, seq), dtype=jnp.int32)
    loss = jax.block_until_ready(categorical_head_loss(logits, target))
    sample = jax.block_until_ready(categorical_head_sample(ks, logits))
    assert loss.shape == (batch, seq) and sample.shape == (batch, seq)

    print("KERNEL_OK")
</pallas_src>

<mosaic_0001>
module attributes {stable_mosaic.version = 11 : i64} {
  func.func @_layernorm_kernel(%arg0: i32, %arg1: memref<16x32xf32, #tpu.memory_space<vmem>>, %arg2: memref<1x32xf32, #tpu.memory_space<vmem>>, %arg3: memref<1x32xf32, #tpu.memory_space<vmem>>, %arg4: memref<16x32xf32, #tpu.memory_space<vmem>>) attributes {dimension_semantics = [#tpu.dimension_semantics<parallel>], iteration_bounds = array<i64: 1>, scalar_prefetch = 0 : i64, scratch_operands = 0 : i64, tpu.core_type = #tpu.core_type<tc>, window_params = [{transform_indices = @transform_0, window_bounds = array<i64: 16, 32>}, {pipeline_mode = #tpu.pipeline_mode<synchronous>, transform_indices = @transform_1, window_bounds = array<i64: 1, 32>}, {pipeline_mode = #tpu.pipeline_mode<synchronous>, transform_indices = @transform_2, window_bounds = array<i64: 1, 32>}, {transform_indices = @transform_3, window_bounds = array<i64: 16, 32>}]} {
    %c0 = arith.constant 0 : index
    %c0_0 = arith.constant 0 : index
    %0 = vector.load %arg1[%c0, %c0_0] : memref<16x32xf32, #tpu.memory_space<vmem>>, vector<16x32xf32>
    %cst = arith.constant dense<0.000000e+00> : vector<16xf32>
    %1 = vector.multi_reduction <add>, %0, %cst [1] : vector<16x32xf32> to vector<16xf32>
    %2 = vector.shape_cast %1 : vector<16xf32> to vector<16x1xf32>
    %cst_1 = arith.constant 3.200000e+01 : f32
    %3 = vector.broadcast %cst_1 : f32 to vector<16x1xf32>
    %4 = arith.divf %2, %3 : vector<16x1xf32>
    %5 = vector.broadcast %4 : vector<16x1xf32> to vector<16x32xf32>
    %6 = arith.subf %0, %5 : vector<16x32xf32>
    %7 = arith.mulf %6, %6 : vector<16x32xf32>
    %cst_2 = arith.constant dense<0.000000e+00> : vector<16xf32>
    %8 = vector.multi_reduction <add>, %7, %cst_2 [1] : vector<16x32xf32> to vector<16xf32>
    %9 = vector.shape_cast %8 : vector<16xf32> to vector<16x1xf32>
    %cst_3 = arith.constant 3.200000e+01 : f32
    %10 = vector.broadcast %cst_3 : f32 to vector<16x1xf32>
    %11 = arith.divf %9, %10 : vector<16x1xf32>
    %cst_4 = arith.constant 9.99999974E-6 : f32
    %12 = vector.broadcast %cst_4 : f32 to vector<16x1xf32>
    %13 = arith.addf %11, %12 : vector<16x1xf32>
    %14 = math.rsqrt %13 : vector<16x1xf32>
    %15 = vector.broadcast %14 : vector<16x1xf32> to vector<16x32xf32>
    %16 = arith.mulf %6, %15 : vector<16x32xf32>
    %c0_5 = arith.constant 0 : index
    %c0_6 = arith.constant 0 : index
    %17 = vector.load %arg2[%c0_5, %c0_6] : memref<1x32xf32, #tpu.memory_space<vmem>>, vector<1x32xf32>
    %18 = vector.broadcast %17 : vector<1x32xf32> to vector<16x32xf32>
    %19 = arith.mulf %16, %18 : vector<16x32xf32>
    %c0_7 = arith.constant 0 : index
    %c0_8 = arith.constant 0 : index
    %20 = vector.load %arg3[%c0_7, %c0_8] : memref<1x32xf32, #tpu.memory_space<vmem>>, vector<1x32xf32>
    %21 = vector.broadcast %20 : vector<1x32xf32> to vector<16x32xf32>
    %22 = arith.addf %19, %21 : vector<16x32xf32>
    %c0_9 = arith.constant 0 : index
    %c0_10 = arith.constant 0 : index
    %23 = vector.load %arg4[%c0_9, %c0_10] : memref<16x32xf32, #tpu.memory_space<vmem>>, vector<16x32xf32>
    tpu.vector_store %arg4[%c0_9, %c0_10], %22 {strides = array<i32>} : memref<16x32xf32, #tpu.memory_space<vmem>>, vector<16x32xf32>,
    return
  }
  func.func @transform_0(%arg0: i32) -> (i32, i32) {
    %c0_i32 = arith.constant 0 : i32
    %c0_i32_0 = arith.constant 0 : i32
    return %arg0, %c0_i32 : i32, i32
  }
  func.func @transform_1(%arg0: i32) -> (i32, i32) {
    %c0_i32 = arith.constant 0 : i32
    %c0_i32_0 = arith.constant 0 : i32
    %c0_i32_1 = arith.constant 0 : i32
    return %c0_i32, %c0_i32_0 : i32, i32
  }
  func.func @transform_2(%arg0: i32) -> (i32, i32) {
    %c0_i32 = arith.constant 0 : i32
    %c0_i32_0 = arith.constant 0 : i32
    %c0_i32_1 = arith.constant 0 : i32
    return %c0_i32, %c0_i32_0 : i32, i32
  }
  func.func @transform_3(%arg0: i32) -> (i32, i32) {
    %c0_i32 = arith.constant 0 : i32
    %c0_i32_0 = arith.constant 0 : i32
    return %arg0, %c0_i32 : i32, i32
  }
}

</mosaic_0001>

<llo_original>
// kernel: tpu_custom_call.1
$region0: #{tpu_custom_call.1}
  #allocation0 [shape = 'u32[]', space=smem, size = 0x4, offset = 0x4, fixed_abs, tag = 'smem constant byte address 0x4 - core index']
  #allocation1 [shape = 'u32[144,128]{1,0:T(1,128)}', space=vmem, size = 0x12000, scoped, tag = 'internal scratch']
  %s0 = inlined_call_operand.hbm [shape: f32[16,32], index: 0, kind: input, shape index: {}]
  %s1 = inlined_call_operand.vmem [shape: f32[1,32], index: 1, kind: input, shape index: {}]
  %s2 = inlined_call_operand.vmem [shape: f32[1,32], index: 2, kind: input, shape index: {}]
  %s3 = inlined_call_operand.hbm [shape: f32[16,32], index: 3, kind: output, shape index: {}]
  %s4 = sld [smem:[#allocation0]]
  $region26: #{tpu_custom_call.1} parent=0
    _
  %s6 = ssub.s32 1, %s4
  %s7 = scalar_select 0, %s6, %s4
  $region1: #{tpu_custom_call.1} parent=0
    #allocation2 [shape = 'u8[8192]{0}', space=vmem, size = 0x2000, scoped, tag = 'input window, operand 0, single buffered']
    #allocation3 [shape = 's32[1]{0}', space=sflag, size = 0x4, scoped, tag = 'scoped memory for tpu_custom_call.1']
    #allocation4 [shape = 's32[1]{0}', space=sflag, size = 0x4, scoped, tag = 'scoped memory for tpu_custom_call.1']
    #allocation5 [shape = 'u8[8192]{0}', space=vmem, size = 0x2000, scoped, tag = 'output window, operand 0, single buffered']
    %8 = vsyncpa [#allocation3], 0
    %9 = vsyncpa [#allocation4], 0
    // Predicated region
    $region2: #{tpu_custom_call.1} parent=1 // pred_check
      _
    $region3: #{tpu_custom_call.1} parent=1 // pred_check_branch
      %11 = sbr.rel (0) target = $region5
    $region4: #{tpu_custom_call.1} parent=1 // pred_region
      %s13 = ssub.s32 256, 256
      %14 = vsyncadd [#allocation3], %s13
      %s15 = sshll.u32 [#allocation2], 4
      %s16 = int_to_ptr.vmem [resolvable:$true] %s15
      %21 = dma.hbm_to_vmem [thread:$0]  %s0, 256, %s16, [#allocation3], 128, 128, 8
    $region5: #{tpu_custom_call.1} parent=1 // pred_fallthru
      _
    // Predicated region
    $region6: #{tpu_custom_call.1} parent=1 // pred_check
      _
    $region7: #{tpu_custom_call.1} parent=1 // pred_check_branch
      %23 = sbr.rel (0) target = $region9
    $region8: #{tpu_custom_call.1} parent=1 // pred_region
      _
    $region9: #{tpu_custom_call.1} parent=1 // pred_fallthru
      _
    // Predicated region
    $region10: #{tpu_custom_call.1} parent=1 // pred_check
      _
    $region11: #{tpu_custom_call.1} parent=1 // pred_check_branch
      %25 = sbr.rel (0) target = $region13
    $region12: #{tpu_custom_call.1} parent=1 // pred_region
      _
    $region13: #{tpu_custom_call.1} parent=1 // pred_fallthru
      _
    // Predicated region
    $region14: #{tpu_custom_call.1} parent=1 // pred_check
      _
    $region15: #{tpu_custom_call.1} parent=1 // pred_check_branch
      %27 = sbr.rel (0) target = $region17
    $region16: #{tpu_custom_call.1} parent=1 // pred_region
      %28 = dma.done [#allocation3], 256
    $region17: #{tpu_custom_call.1} parent=1 // pred_fallthru
      _
    %v29 = vld [vmem:[#allocation2] sm:$0xff]
    %v30 = vld [vmem:[#allocation2 + $0x8] sm:$0xff]
    %vm31 = vcmask 261120
    %v32 = vsel %vm31, %v29, 0.0
    %33 = vadd.xlane.f32.xlu0 %v32
    %v34 = vpop.xlane.xlu0 %33
    %v35 = vsel %vm31, %v30, 0.0
    %36 = vadd.xlane.f32.xlu0 %v35
    %v37 = vpop.xlane.xlu0 %36
    %v38 = vrcp.pop 32.0
    %v39 = vmul.f32 %v34, %v38
    %v40 = vmul.f32 %v37, %v38
    %v41 = vsub.f32 %v29, %v39
    %v42 = vsub.f32 %v30, %v40
    %v43 = vmul.f32 %v41, %v41
    %v44 = vmul.f32 %v42, %v42
    %v45 = vsel %vm31, %v43, 0.0
    %46 = vadd.xlane.f32.xlu0 %v45
    %v47 = vpop.xlane.xlu0 %46
    %v48 = vsel %vm31, %v44, 0.0
    %49 = vadd.xlane.f32.xlu0 %v48
    %v50 = vpop.xlane.xlu0 %49
    %v51 = vmul.f32 %v47, %v38
    %v52 = vmul.f32 %v50, %v38
    %v53 = vadd.f32 %v51, 1e-05
    %v54 = vadd.f32 %v52, 1e-05
    %v55 = vrsqrt.pop %v53
    %v56 = vrsqrt.pop %v54
    %v57 = vmul.f32 %v41, %v55
    %v58 = vmul.f32 %v42, %v56
    %v59 = vld [vmem:[%s1] sm:$0x1]
    %v61 = vlaneseq
    %v62 = vshrl.u32 %v61, 7
    %v63 = vsub.s32 0, %v62
    %v64 = vrot.slane %v59, %v63
    %v66 = vmul.f32 %v57, %v64
    %v67 = vmul.f32 %v58, %v64
    %v68 = vld [vmem:[%s2] sm:$0x1]
    %v70 = vlaneseq
    %v71 = vshrl.u32 %v70, 7
    %v72 = vsub.s32 0, %v71
    %v73 = vrot.slane %v68, %v72
    %v75 = vadd.f32 %v66, %v73
    %v76 = vadd.f32 %v67, %v73
    %77 = vst.msk [vmem:[#allocation5] sm:$0xff] %vm31, %v75
    %78 = vst.msk [vmem:[#allocation5 + $0x8] sm:$0xff] %vm31, %v76
    // Predicated region
    $region18: #{tpu_custom_call.1} parent=1 // pred_check
      _
    $region19: #{tpu_custom_call.1} parent=1 // pred_check_branch
      %80 = sbr.rel (0) target = $region21
    $region20: #{tpu_custom_call.1} parent=1 // pred_region
      %s82 = ssub.s32 256, 256
      %83 = vsyncadd [#allocation4], %s82
      %s84 = sshll.u32 [#allocation5], 4
      %s85 = int_to_ptr.vmem [resolvable:$true] %s84
      %90 = dma.vmem_to_hbm [thread:$0]  %s85, 256, %s3, [#allocation4], 128, 128, 8
    $region21: #{tpu_custom_call.1} parent=1 // pred_fallthru
      _
    // Predicated region
    $region22: #{tpu_custom_call.1} parent=1 // pred_check
      _
    $region23: #{tpu_custom_call.1} parent=1 // pred_check_branch
      %92 = sbr.rel (0) target = $region25
    $region24: #{tpu_custom_call.1} parent=1 // pred_region
      %93 = dma.done [#allocation4], 256
    $region25: #{tpu_custom_call.1} parent=1 // pred_fallthru
      _
    %94 = vsyncpa [#allocation3], 1
    %95 = vsyncpa [#allocation4], 1

</llo_original>
